<compile_context>
chip_gen: v7x
topology: tpu7x:2x2x1
jax: 0.10.0
libtpu: 0.0.40
codegen_flags: <defaults>
</compile_context>

<pallas_src>
import jax
import jax.numpy as jnp
from jax.experimental import pallas as pl
from jax.experimental.pallas import tpu as pltpu

_LANES = 128  # TPU vreg lane width.


def _round_up(x, m):
    return ((x + m - 1) // m) * m


# --------------------------------------------------------------------------
# Kernel: one (TM, TN) output tile; accumulate over the K grid axis in a f32
# VMEM scratch, bias-add + downcast on the last K step.
# --------------------------------------------------------------------------
def _matmul_bias_kernel(x_ref, w_ref, b_ref, o_ref, acc_ref):
    @pl.when(pl.program_id(2) == 0)
    def _():
        acc_ref[...] = jnp.zeros_like(acc_ref)

    acc_ref[...] += jnp.dot(
        x_ref[...], w_ref[...], preferred_element_type=jnp.float32
    )

    @pl.when(pl.program_id(2) == pl.num_programs(2) - 1)
    def _():
        o_ref[...] = (acc_ref[...] + b_ref[...]).astype(o_ref.dtype)


# --------------------------------------------------------------------------
# Init-time parameter prep (call once when weights are set, NOT per forward).
# --------------------------------------------------------------------------
def make_fused_params(w, b, *, kernel_size=3, stride=2,
                      compute_dtype=jnp.bfloat16):
    """Fold avg_pool1d(k, s) into the Linear weights.

    Returns lane-dense effective params: W_eff (in, padded_len) in
    `compute_dtype`, b_eff (1, padded_len) in f32, plus out_len / padded_len.
    The pooling matrix P is built directly at padded width (zero columns past
    out_len), so one dot produces the padded weight with no extra jnp.pad pass.
    """
    in_features, out_features = w.shape
    out_len = (out_features - kernel_size) // stride + 1
    padded_len = _round_up(max(out_len, 1), _LANES)

    rows = jnp.arange(out_features)[:, None]
    cols = jnp.arange(padded_len)[None, :]
    start = stride * cols
    p = jnp.where(
        (rows >= start) & (rows < start + kernel_size) & (cols < out_len),
        jnp.float32(1.0 / kernel_size),
        jnp.float32(0.0),
    )

    w_eff = jnp.dot(w.astype(jnp.float32), p)                       # (in, padded_len)
    b_eff = jnp.dot(b.astype(jnp.float32).reshape(1, -1), p)        # (1, padded_len)

    return {
        "w_eff": w_eff.astype(compute_dtype),  # MXU-native dtype (bf16 on v5e/v6e/v7x)
        "b_eff": b_eff,                        # bias stays f32
        "out_len": out_len,
        "padded_len": padded_len,
        "compute_dtype": compute_dtype,
    }


# --------------------------------------------------------------------------
# Forward hot path: fused linear + avg-pool (pool already folded into params).
# --------------------------------------------------------------------------
def linear_avgpool_padded(x, fused, *, use_pallas=None):
    """x: (B, in_features).  Returns (out_padded (B, padded_len) f32, out_len).

    The pooled result is out_padded[:, :out_len]; the padded lane-dense buffer
    is returned so downstream consumers can avoid the narrowing copy.
    """
    B, K = x.shape
    w_eff = fused["w_eff"]
    b_eff = fused["b_eff"]
    out_len = fused["out_len"]
    padded_len = fused["padded_len"]
    cdt = fused["compute_dtype"]

    if use_pallas is None:
        # Below this, pallas_call dispatch + DMA latency dwarfs the dot; let
        # XLA fuse it.  Above it, the tiled Pallas path pipelines HBM<->VMEM.
        use_pallas = B * K * padded_len >= (1 << 20)

    if not use_pallas:
        out = jnp.dot(x.astype(cdt), w_eff,
                      preferred_element_type=jnp.float32) + b_eff
        return out, out_len

    # ---- Tile sizes: lane dims are multiples of 128 (match all MXU gens);
    # pick the largest of {512, 256, 128} that divides the padded extent.
    sublane = 16 if cdt == jnp.bfloat16 else 8
    tm = min(128, _round_up(B, sublane))
    tn = next(t for t in (512, 256, 128) if padded_len % t == 0)
    kp = _round_up(K, _LANES)
    tk = next(t for t in (512, 256, 128) if kp % t == 0)
    mp = _round_up(B, tm)

    x_p = x.astype(cdt)
    if (mp, kp) != (B, K):
        x_p = jnp.pad(x_p, ((0, mp - B), (0, kp - K)))
    w_p = w_eff
    if kp != K:
        w_p = jnp.pad(w_p, ((0, kp - K), (0, 0)))

    grid = (mp // tm, padded_len // tn, kp // tk)

    out_padded = pl.pallas_call(
        _matmul_bias_kernel,
        out_shape=jax.ShapeDtypeStruct((mp, padded_len), jnp.float32),
        grid_spec=pltpu.PrefetchScalarGridSpec(
            num_scalar_prefetch=0,
            grid=grid,
            in_specs=[
                pl.BlockSpec((tm, tk), lambda i, j, k: (i, k)),   # x tile
                pl.BlockSpec((tk, tn), lambda i, j, k: (k, j)),   # W_eff tile
                pl.BlockSpec((1, tn), lambda i, j, k: (0, j)),    # bias tile (f32)
            ],
            out_specs=pl.BlockSpec((tm, tn), lambda i, j, k: (i, j)),
            scratch_shapes=[pltpu.VMEM((tm, tn), jnp.float32)],   # f32 accumulator
        ),
        compiler_params=pltpu.CompilerParams(
            # M / N parallel (megacore-shardable on v7x), K reduction arbitrary.
            dimension_semantics=("parallel", "parallel", "arbitrary"),
        ),
    )(x_p, w_p, b_eff)

    return out_padded[:B], out_len


def my_module_forward(x, fused, *, use_pallas=None):
    """Exact semantics of MyModule.forward: the pooled tensor is computed and
    discarded (as in the PyTorch module); the returned value is
    logspace(0, 1, steps=C) where C is the pooled channel dim (== 1)."""
    _ = linear_avgpool_padded(x, fused, use_pallas=use_pallas)  # hot path
    channel_dim = 1  # x.unsqueeze(1) -> pooled channel dim is statically 1
    return jnp.logspace(0.0, 1.0, num=channel_dim, dtype=jnp.float32)


if __name__ == "__main__":
    B = 2
    in_features = 32
    out_features = 16

    key = jax.random.PRNGKey(0)
    kx, kw, kb = jax.random.split(key, 3)

    # PyTorch-style uniform(-1/sqrt(in), 1/sqrt(in)) init.
    bound = 1.0 / (in_features ** 0.5)
    w = jax.random.uniform(kw, (in_features, out_features), jnp.float32,
                           minval=-bound, maxval=bound)
    b = jax.random.uniform(kb, (out_features,), jnp.float32,
                           minval=-bound, maxval=bound)
    x = jax.random.normal(kx, (B, in_features), jnp.float32)

    # Fold the avg-pool into the weights ONCE (init-time, not per call).
    fused = make_fused_params(w, b, compute_dtype=jnp.bfloat16)

    # Run the Pallas kernel (forced on, so the tiled kernel is exercised even
    # at this toy size where the auto-dispatch would pick the plain XLA dot).
    out_padded, out_len = linear_avgpool_padded(x, fused, use_pallas=True)
    out_padded = jax.block_until_ready(out_padded)
    pooled = out_padded[:, :out_len]
    assert pooled.shape == (B, out_len)

    # Reference 1 (tight): identical bf16-quantized inputs, f32 accumulation.
    ref_fused = (jnp.dot(x.astype(jnp.bfloat16), fused["w_eff"],
                         preferred_element_type=jnp.float32)
                 + fused["b_eff"])[:, :out_len]
    assert bool(jnp.allclose(pooled, ref_fused, atol=1e-4, rtol=1e-4))

    # Reference 2 (loose, covers bf16 quantization + pool-fold semantics):
    # full-precision linear then explicit k=3 / s=2 average pool.
    y_ref = x @ w + b
    pooled_ref = jnp.stack(
        [jnp.mean(y_ref[:, 2 * j:2 * j + 3], axis=-1) for j in range(out_len)],
        axis=-1,
    )
    assert bool(jnp.allclose(pooled, pooled_ref, atol=3e-2, rtol=3e-2))

    # Module output (exact PyTorch parity): logspace(0, 1, steps=1) == [1.0].
    out = jax.block_until_ready(my_module_forward(x, fused))
    assert out.shape == (1,) and abs(float(out[0]) - 1.0) < 1e-6

    print("KERNEL_OK")
</pallas_src>

<mosaic_0001>
module attributes {stable_mosaic.version = 11 : i64} {
  func.func @_matmul_bias_kernel(%arg0: i32, %arg1: i32, %arg2: i32, %arg3: memref<16x128xbf16, #tpu.memory_space<vmem>>, %arg4: memref<128x128xbf16, #tpu.memory_space<vmem>>, %arg5: memref<1x128xf32, #tpu.memory_space<vmem>>, %arg6: memref<16x128xf32, #tpu.memory_space<vmem>>, %arg7: memref<16x128xf32, #tpu.memory_space<vmem>>) attributes {dimension_semantics = [#tpu.dimension_semantics<parallel>, #tpu.dimension_semantics<parallel>, #tpu.dimension_semantics<arbitrary>], iteration_bounds = array<i64: 1, 1, 1>, scalar_prefetch = 0 : i64, scratch_operands = 1 : i64, tpu.core_type = #tpu.core_type<tc>, window_params = [{transform_indices = @transform_0, window_bounds = array<i64: 16, 128>}, {transform_indices = @transform_1, window_bounds = array<i64: 128, 128>}, {transform_indices = @transform_2, window_bounds = array<i64: 1, 128>}, {transform_indices = @transform_3, window_bounds = array<i64: 16, 128>}]} {
    %c0_i32 = arith.constant 0 : i32
    %0 = arith.cmpi eq, %arg2, %c0_i32 : i32
    %1 = arith.extui %0 : i1 to i32
    %c0_i32_0 = arith.constant 0 : i32
    %2 = arith.cmpi ne, %1, %c0_i32_0 : i32
    scf.if %2 {
      %cst_10 = arith.constant 0.000000e+00 : f32
      %12 = vector.broadcast %cst_10 : f32 to vector<16x128xf32>
      %c0_11 = arith.constant 0 : index
      %c0_12 = arith.constant 0 : index
      %13 = vector.load %arg7[%c0_11, %c0_12] : memref<16x128xf32, #tpu.memory_space<vmem>>, vector<16x128xf32>
      tpu.vector_store %arg7[%c0_11, %c0_12], %12 {strides = array<i32>} : memref<16x128xf32, #tpu.memory_space<vmem>>, vector<16x128xf32>,
    } else {
    }
    %c0 = arith.constant 0 : index
    %c0_1 = arith.constant 0 : index
    %3 = vector.load %arg7[%c0, %c0_1] : memref<16x128xf32, #tpu.memory_space<vmem>>, vector<16x128xf32>
    %c0_2 = arith.constant 0 : index
    %c0_3 = arith.constant 0 : index
    %4 = vector.load %arg3[%c0_2, %c0_3] : memref<16x128xbf16, #tpu.memory_space<vmem>>, vector<16x128xbf16>
    %c0_4 = arith.constant 0 : index
    %c0_5 = arith.constant 0 : index
    %5 = vector.load %arg4[%c0_4, %c0_5] : memref<128x128xbf16, #tpu.memory_space<vmem>>, vector<128x128xbf16>
    %cst = arith.constant dense<0.000000e+00> : vector<16x128xf32>
    %6 = tpu.matmul %4, %5, %cst {dimension_numbers = #tpu.dot_dimension_numbers<[1], [0], [0], [1], [0, 0, 1, 1], [], []>} : vector<16x128xbf16>, vector<128x128xbf16>, vector<16x128xf32> -> vector<16x128xf32>
    %7 = arith.addf %3, %6 : vector<16x128xf32>
    %c0_6 = arith.constant 0 : index
    %c0_7 = arith.constant 0 : index
    %8 = vector.load %arg7[%c0_6, %c0_7] : memref<16x128xf32, #tpu.memory_space<vmem>>, vector<16x128xf32>
    tpu.vector_store %arg7[%c0_6, %c0_7], %7 {strides = array<i32>} : memref<16x128xf32, #tpu.memory_space<vmem>>, vector<16x128xf32>,
    %c0_i32_8 = arith.constant 0 : i32
    %9 = arith.cmpi eq, %arg2, %c0_i32_8 : i32
    %10 = arith.extui %9 : i1 to i32
    %c0_i32_9 = arith.constant 0 : i32
    %11 = arith.cmpi ne, %10, %c0_i32_9 : i32
    scf.if %11 {
      %c0_10 = arith.constant 0 : index
      %c0_11 = arith.constant 0 : index
      %12 = vector.load %arg7[%c0_10, %c0_11] : memref<16x128xf32, #tpu.memory_space<vmem>>, vector<16x128xf32>
      %c0_12 = arith.constant 0 : index
      %c0_13 = arith.constant 0 : index
      %13 = vector.load %arg5[%c0_12, %c0_13] : memref<1x128xf32, #tpu.memory_space<vmem>>, vector<1x128xf32>
      %14 = vector.broadcast %13 : vector<1x128xf32> to vector<16x128xf32>
      %15 = arith.addf %12, %14 : vector<16x128xf32>
      %c0_14 = arith.constant 0 : index
      %c0_15 = arith.constant 0 : index
      %16 = vector.load %arg6[%c0_14, %c0_15] : memref<16x128xf32, #tpu.memory_space<vmem>>, vector<16x128xf32>
      tpu.vector_store %arg6[%c0_14, %c0_15], %15 {strides = array<i32>} : memref<16x128xf32, #tpu.memory_space<vmem>>, vector<16x128xf32>,
    } else {
    }
    return
  }
  func.func @transform_0(%arg0: i32, %arg1: i32, %arg2: i32) -> (i32, i32) {
    %c0_i32 = arith.constant 0 : i32
    return %arg0, %arg2 : i32, i32
  }
  func.func @transform_1(%arg0: i32, %arg1: i32, %arg2: i32) -> (i32, i32) {
    %c0_i32 = arith.constant 0 : i32
    return %arg2, %arg1 : i32, i32
  }
  func.func @transform_2(%arg0: i32, %arg1: i32, %arg2: i32) -> (i32, i32) {
    %c0_i32 = arith.constant 0 : i32
    %c0_i32_0 = arith.constant 0 : i32
    return %c0_i32, %arg1 : i32, i32
  }
  func.func @transform_3(%arg0: i32, %arg1: i32, %arg2: i32) -> (i32, i32) {
    %c0_i32 = arith.constant 0 : i32
    return %arg0, %arg1 : i32, i32
  }
}

</mosaic_0001>

<llo_original>
// kernel: tpu_custom_call.1
$region0: #{tpu_custom_call.1}
  #allocation0 [shape = 'u32[]', space=smem, size = 0x4, offset = 0x4, fixed_abs, tag = 'smem constant byte address 0x4 - core index']
  #allocation1 [shape = 'u32[144,128]{1,0:T(1,128)}', space=vmem, size = 0x12000, scoped, tag = 'internal scratch']
  #allocation2 [shape = 'f32[16,128]{1,0:T(8,128)}', space=vmem, size = 0x2000, scoped, tag = 'scratch operand']
  %s0 = inlined_call_operand.hbm [shape: bf16[16,128], index: 0, kind: input, shape index: {}]
  %s1 = inlined_call_operand.hbm [shape: bf16[128,128], index: 1, kind: input, shape index: {}]
  %s2 = inlined_call_operand.vmem [shape: f32[1,128], index: 2, kind: input, shape index: {}]
  %s3 = inlined_call_operand.hbm [shape: f32[16,128], index: 3, kind: output, shape index: {}]
  %s4 = sld [smem:[#allocation0]]
  $region38: #{tpu_custom_call.1} parent=0
    _
  %s6 = ssub.s32 1, %s4
  %s7 = scalar_select 0, %s6, %s4
  $region1: #{tpu_custom_call.1} parent=0
    #allocation3 [shape = 'u8[4096]{0}', space=vmem, size = 0x1000, scoped, tag = 'input window, operand 0, single buffered']
    #allocation4 [shape = 's32[1]{0}', space=sflag, size = 0x4, scoped, tag = 'scoped memory for tpu_custom_call.1']
    #allocation5 [shape = 's32[1]{0}', space=sflag, size = 0x4, scoped, tag = 'scoped memory for tpu_custom_call.1']
    #allocation6 [shape = 'u8[32768]{0}', space=vmem, size = 0x8000, scoped, tag = 'input window, operand 1, single buffered']
    #allocation7 [shape = 's32[1]{0}', space=sflag, size = 0x4, scoped, tag = 'scoped memory for tpu_custom_call.1']
    #allocation8 [shape = 'u8[8192]{0}', space=vmem, size = 0x2000, scoped, tag = 'output window, operand 0, single buffered']
    %8 = vsyncpa [#allocation4], 0
    %9 = vsyncpa [#allocation7], 0
    %10 = vsyncpa [#allocation5], 0
    // Predicated region
    $region2: #{tpu_custom_call.1} parent=1 // pred_check
      _
    $region3: #{tpu_custom_call.1} parent=1 // pred_check_branch
      %12 = sbr.rel (0) target = $region5
    $region4: #{tpu_custom_call.1} parent=1 // pred_region
      %s14 = ssub.s32 128, 128
      %15 = vsyncadd [#allocation4], %s14
      %s16 = sshll.u32 [#allocation3], 4
      %s17 = int_to_ptr.vmem [resolvable:$true] %s16
      %22 = dma.hbm_to_vmem [thread:$0]  %s0, 128, %s17, [#allocation4], 64, 64, 4
    $region5: #{tpu_custom_call.1} parent=1 // pred_fallthru
      _
    // Predicated region
    $region6: #{tpu_custom_call.1} parent=1 // pred_check
      _
    $region7: #{tpu_custom_call.1} parent=1 // pred_check_branch
      %24 = sbr.rel (0) target = $region9
    $region8: #{tpu_custom_call.1} parent=1 // pred_region
      %s26 = ssub.s32 1024, 1024
      %27 = vsyncadd [#allocation7], %s26
      %s28 = sshll.u32 [#allocation6], 4
      %s29 = int_to_ptr.vmem [resolvable:$true] %s28
      %34 = dma.hbm_to_vmem [thread:$0]  %s1, 1024, %s29, [#allocation7], 64, 64, 4
    $region9: #{tpu_custom_call.1} parent=1 // pred_fallthru
      _
    // Predicated region
    $region10: #{tpu_custom_call.1} parent=1 // pred_check
      _
    $region11: #{tpu_custom_call.1} parent=1 // pred_check_branch
      %36 = sbr.rel (0) target = $region13
    $region12: #{tpu_custom_call.1} parent=1 // pred_region
      _
    $region13: #{tpu_custom_call.1} parent=1 // pred_fallthru
      _
    // Predicated region
    $region14: #{tpu_custom_call.1} parent=1 // pred_check
      _
    $region15: #{tpu_custom_call.1} parent=1 // pred_check_branch
      %38 = sbr.rel (0) target = $region17
    $region16: #{tpu_custom_call.1} parent=1 // pred_region
      %39 = dma.done [#allocation4], 128
    $region17: #{tpu_custom_call.1} parent=1 // pred_fallthru
      _
    // Predicated region
    $region18: #{tpu_custom_call.1} parent=1 // pred_check
      _
    $region19: #{tpu_custom_call.1} parent=1 // pred_check_branch
      %41 = sbr.rel (0) target = $region21
    $region20: #{tpu_custom_call.1} parent=1 // pred_region
      %42 = dma.done [#allocation7], 1024
    $region21: #{tpu_custom_call.1} parent=1 // pred_fallthru
      _
    %p44 = scmp.eq.s32.totalorder 0, 0
    // Predicated region
    $region22: #{tpu_custom_call.1} parent=1 // pred_check
      %p45 = pneg %p44
    $region23: #{tpu_custom_call.1} parent=1 // pred_check_branch
      %47 = sbr.rel (%p45) target = $region25
    $region24: #{tpu_custom_call.1} parent=1 // pred_region
      %48 = vst [vmem:[#allocation2] sm:$0xff] 0.0
      %49 = vst [vmem:[#allocation2 + $0x8] sm:$0xff] 0.0
    $region25: #{tpu_custom_call.1} parent=1 // pred_fallthru
      _
    %v50 = vld [vmem:[#allocation2] sm:$0xff]
    %v51 = vld [vmem:[#allocation2 + $0x8] sm:$0xff]
    %v52 = vld [vmem:[#allocation3] sm:$0xf]
    %v53 = vld [vmem:[#allocation3 + $0x4] sm:$0xf]
    %v54 = vld [vmem:[#allocation6] sm:$0xf]
    %v55 = vld [vmem:[#allocation6 + $0x4] sm:$0xf]
    %v56 = vld [vmem:[#allocation6 + $0x8] sm:$0xf]
    %v57 = vld [vmem:[#allocation6 + $0xc] sm:$0xf]
    %v58 = vld [vmem:[#allocation6 + $0x10] sm:$0xf]
    %v59 = vld [vmem:[#allocation6 + $0x14] sm:$0xf]
    %v60 = vld [vmem:[#allocation6 + $0x18] sm:$0xf]
    %v61 = vld [vmem:[#allocation6 + $0x1c] sm:$0xf]
    %v62 = vld [vmem:[#allocation6 + $0x20] sm:$0xf]
    %v63 = vld [vmem:[#allocation6 + $0x24] sm:$0xf]
    %v64 = vld [vmem:[#allocation6 + $0x28] sm:$0xf]
    %v65 = vld [vmem:[#allocation6 + $0x2c] sm:$0xf]
    %v66 = vld [vmem:[#allocation6 + $0x30] sm:$0xf]
    %v67 = vld [vmem:[#allocation6 + $0x34] sm:$0xf]
    %v68 = vld [vmem:[#allocation6 + $0x38] sm:$0xf]
    %v69 = vld [vmem:[#allocation6 + $0x3c] sm:$0xf]
    %v72 = vunpack.c.l.b16 %v52
    %v73 = vunpack.c.l.b16 %v53
    %v74 = vpack.c.b16 %v73, %v72
    %v92 = vunpack.c.l.b16 %v54
    %v93 = vunpack.c.l.b16 %v55
    %v94 = vunpack.c.l.b16 %v56
    %v95 = vunpack.c.l.b16 %v57
    %v96 = vunpack.c.l.b16 %v58
    %v97 = vunpack.c.l.b16 %v59
    %v98 = vunpack.c.l.b16 %v60
    %v99 = vunpack.c.l.b16 %v61
    %v100 = vunpack.c.l.b16 %v62
    %v101 = vunpack.c.l.b16 %v63
    %v102 = vunpack.c.l.b16 %v64
    %v103 = vunpack.c.l.b16 %v65
    %v104 = vunpack.c.l.b16 %v66
    %v105 = vunpack.c.l.b16 %v67
    %v106 = vunpack.c.l.b16 %v68
    %v107 = vunpack.c.l.b16 %v69
    %v108 = vpack.c.b16 %v93, %v92
    %v109 = vpack.c.b16 %v95, %v94
    %v110 = vpack.c.b16 %v97, %v96
    %v111 = vpack.c.b16 %v99, %v98
    %v112 = vpack.c.b16 %v101, %v100
    %v113 = vpack.c.b16 %v103, %v102
    %v114 = vpack.c.b16 %v105, %v104
    %v115 = vpack.c.b16 %v107, %v106
    %124 = vmatprep.subr.bf16.mxu0 0
    %125 = vmatpush1.bf16.msra.mxu0 %v108
    %126 = vmatprep.subr.bf16.mxu0 0
    %127 = vmatpush1.bf16.msra.mxu0 %v109
    %128 = vmatprep.subr.bf16.mxu0 0
    %129 = vmatpush1.bf16.msra.mxu0 %v110
    %130 = vmatprep.subr.bf16.mxu0 0
    %131 = vmatpush1.bf16.msra.mxu0 %v111
    %132 = vmatprep.subr.bf16.mxu0 0
    %133 = vmatpush1.bf16.msra.mxu0 %v112
    %134 = vmatprep.subr.bf16.mxu0 0
    %135 = vmatpush1.bf16.msra.mxu0 %v113
    %136 = vmatprep.subr.bf16.mxu0 0
    %137 = vmatpush1.bf16.msra.mxu0 %v114
    %138 = vmatprep.subr.bf16.mxu0 0
    %139 = vmatpush1.bf16.msra.mxu0 %v115
    %140 = vmatprep.subr.bf16.mxu0 0
    %141 = vmatpush1.bf16.msra.mxu0 0
    %142 = vmatprep.subr.bf16.mxu0 0
    %143 = vmatpush1.bf16.msra.mxu0 0
    %144 = vmatprep.subr.bf16.mxu0 0
    %145 = vmatpush1.bf16.msra.mxu0 0
    %146 = vmatprep.subr.bf16.mxu0 0
    %147 = vmatpush1.bf16.msra.mxu0 0
    %148 = vmatprep.subr.bf16.mxu0 0
    %149 = vmatpush1.bf16.msra.mxu0 0
    %150 = vmatprep.subr.bf16.mxu0 0
    %151 = vmatpush1.bf16.msra.mxu0 0
    %152 = vmatprep.subr.bf16.mxu0 0
    %153 = vmatpush1.bf16.msra.mxu0 0
    %154 = vmatprep.subr.bf16.mxu0 0
    %155 = vmatpush1.bf16.msra.mxu0 0
    %156 = vmatprep.mubr.bf16.mxu0 0
    %157 = vmatmul.mubr.bf16.gmra.mrb[0].mxu0 %v74
    %v158 = vpop.f32.mrb[0].mxu0
    %v159 = vadd.f32 0.0, %v158
    %v160 = vpop.f32.mrb[0].mxu0
    %v161 = vpop.f32.mrb[0].mxu0
    %v162 = vadd.f32 0.0, %v161
    %v163 = vpop.f32.mrb[0].mxu0
    %164 = vdwg.mxu0
    %v165 = vadd.f32 %v50, %v159
    %v166 = vadd.f32 %v51, %v162
    %167 = vst [vmem:[#allocation2] sm:$0xff] %v165
    %168 = vst [vmem:[#allocation2 + $0x8] sm:$0xff] %v166
    // Predicated region
    $region26: #{tpu_custom_call.1} parent=1 // pred_check
      %p169 = pneg %p44
    $region27: #{tpu_custom_call.1} parent=1 // pred_check_branch
      %171 = sbr.rel (%p169) target = $region29
    $region28: #{tpu_custom_call.1} parent=1 // pred_region
      %v172 = vld [vmem:[#allocation2] sm:$0xff]
      %v173 = vld [vmem:[#allocation2 + $0x8] sm:$0xff]
      %v174 = vld [vmem:[%s2] sm:$0x1]
      %v176 = vlaneseq
      %v177 = vshrl.u32 %v176, 7
      %v178 = vsub.s32 0, %v177
      %v179 = vrot.slane %v174, %v178
      %v181 = vadd.f32 %v172, %v179
      %v182 = vadd.f32 %v173, %v179
      %183 = vst [vmem:[#allocation8] sm:$0xff] %v181
      %184 = vst [vmem:[#allocation8 + $0x8] sm:$0xff] %v182
    $region29: #{tpu_custom_call.1} parent=1 // pred_fallthru
      _
    // Predicated region
    $region30: #{tpu_custom_call.1} parent=1 // pred_check
      _
    $region31: #{tpu_custom_call.1} parent=1 // pred_check_branch
      %186 = sbr.rel (0) target = $region33
    $region32: #{tpu_custom_call.1} parent=1 // pred_region
      %s188 = ssub.s32 256, 256
      %189 = vsyncadd [#allocation5], %s188
      %s190 = sshll.u32 [#allocation8], 4
      %s191 = int_to_ptr.vmem [resolvable:$true] %s190
      %196 = dma.vmem_to_hbm [thread:$0]  %s191, 256, %s3, [#allocation5], 128, 128, 8
    $region33: #{tpu_custom_call.1} parent=1 // pred_fallthru
      _
    // Predicated region
    $region34: #{tpu_custom_call.1} parent=1 // pred_check
      _
    $region35: #{tpu_custom_call.1} parent=1 // pred_check_branch
      %198 = sbr.rel (0) target = $region37
    $region36: #{tpu_custom_call.1} parent=1 // pred_region
      %199 = dma.done [#allocation5], 256
    $region37: #{tpu_custom_call.1} parent=1 // pred_fallthru
      _
    %200 = vsyncpa [#allocation4], 1
    %201 = vsyncpa [#allocation7], 1
    %202 = vsyncpa [#allocation5], 1

</llo_original>
